<compile_context>
chip_gen: v7x
topology: tpu7x:2x2x1
jax: 0.10.0
libtpu: 0.0.40
codegen_flags: <defaults>
</compile_context>

<pallas_src>
import functools

import jax
import jax.numpy as jnp
from jax import lax
from jax.experimental import pallas as pl
from jax.experimental.pallas import tpu as pltpu


def _round_up(x: int, m: int) -> int:
    return ((x + m - 1) // m) * m


def _pick_tile(s: int, target: int) -> int:
    """Largest tile <= target that divides s, preferring 256/128-multiples
    (lane-dense score tiles / full 256x256 MXU), then 8-multiples (sublane rule)."""
    if s <= target:
        return s
    for align in (256, 128, 8):
        t = (target // align) * align
        while t >= align:
            if s % t == 0:
                return t
            t -= align
    # TODO(synk): prime/odd S falls back to a single full-sequence tile; pad+mask
    #             instead if that ever exceeds VMEM.
    return s


def _vmem_limit_bytes() -> int:
    """<=64 MiB on 128 MiB-VMEM chips (v5e/v6e), <=32 MiB on v7x (64 MiB VMEM)."""
    cap = 128 * 1024 * 1024
    try:
        cap = int(pltpu.get_tpu_info().vmem_capacity_bytes)
    except Exception:
        pass
    return int(min(cap // 2, 64 * 1024 * 1024))


def _block_spec(shape, index_map, buffers=None):
    """BlockSpec with optional N-deep buffering; falls back to default double
    buffering if pipeline_mode is unsupported by this JAX version."""
    if buffers is not None and hasattr(pl, "Buffered"):
        try:
            return pl.BlockSpec(shape, index_map, pipeline_mode=pl.Buffered(buffers))
        except TypeError:
            pass
    return pl.BlockSpec(shape, index_map)


def _kv_projection_kernel(h_ref, wkv_ref, kv_ref):
    # h_ref  : (1, TP, F)        feature tile
    # wkv_ref: (F, HdP+OP)       fused [Wk | Wv] weight slab (resident)
    # kv_ref : (1, TP, HdP+OP)   projected [K | V] tile
    kv_ref[0] = jnp.dot(h_ref[0], wkv_ref[...],
                        preferred_element_type=jnp.float32).astype(kv_ref.dtype)


def _flash_attention_head_kernel(hq_ref, kv_ref, wq_ref, o_ref,
                                 q_sc, m_sc, l_sc, acc_sc, *, hd_pad):
    # hq_ref: (1, TQ, F)         Q-side features for this (b, qi) tile
    # kv_ref: (1, TKV, HdP+OP)   pre-projected [K | V] tile for this (b, ki)
    # wq_ref: (F, HdP)           Wq (scale folded in, zero-padded, resident)
    # o_ref : (1, TQ, OP)        output tile (resident across ki)
    ki = pl.program_id(2)
    mxu_dtype = q_sc.dtype

    @pl.when(ki == 0)
    def _():
        # Project queries exactly once per (b, qi) tile; scale already folded into Wq.
        q_sc[...] = jnp.dot(hq_ref[0], wq_ref[...],
                            preferred_element_type=jnp.float32).astype(q_sc.dtype)
        m_sc[...] = jnp.full_like(m_sc, -jnp.inf)
        l_sc[...] = jnp.zeros_like(l_sc)
        acc_sc[...] = jnp.zeros_like(acc_sc)

    kv = kv_ref[0]                       # (TKV, HdP+OP), compute dtype
    k = kv[:, :hd_pad]                   # (TKV, HdP) -- 128-lane-aligned slice
    v = kv[:, hd_pad:]                   # (TKV, OP)

    # scores = q @ k^T : contract over Hd directly, no transpose materialization.
    s = lax.dot_general(q_sc[...], k,
                        dimension_numbers=(((1,), (1,)), ((), ())),
                        preferred_element_type=jnp.float32)  # (TQ, TKV)

    # Online softmax update (all f32).
    m_prev = m_sc[...]
    m_new = jnp.maximum(m_prev, jnp.max(s, axis=-1, keepdims=True))
    alpha = jnp.exp(m_prev - m_new)
    p = jnp.exp(s - m_new)
    l_sc[...] = alpha * l_sc[...] + jnp.sum(p, axis=-1, keepdims=True)
    acc_sc[...] = alpha * acc_sc[...] + jnp.dot(p.astype(mxu_dtype), v,
                                                preferred_element_type=jnp.float32)
    m_sc[...] = m_new

    @pl.when(ki == pl.num_programs(2) - 1)
    def _():
        o_ref[0] = (acc_sc[...] * pl.reciprocal(l_sc[...], approx=True)
                    ).astype(o_ref.dtype)


def attention_head_pallas(features, wk, wq, wv, *,
                          q_tile=512, kv_tile=512, proj_tile=512,
                          kv_buffers=3, use_bf16=True):
    """features: (B, S, F); wk/wq: (hidden, F); wv: (out, F) -- PyTorch Linear layout."""
    B, S, F = features.shape
    Hd = wk.shape[0]
    O = wv.shape[0]
    scale = 1.0 / (F ** 0.5)              # L = features.shape[-1] per the PyTorch code

    HdP = _round_up(Hd, 128)               # lane-dense head dim
    OP = _round_up(O, 128)                  # lane-dense output dim
    KVW = HdP + OP

    # (in, out) layout, scale folded into Wq, zero-padded to lane-dense widths,
    # K|V fused into one weight slab.
    wq_p = jnp.zeros((F, HdP), jnp.float32).at[:, :Hd].set(wq.T * scale)
    wk_p = jnp.zeros((F, HdP), jnp.float32).at[:, :Hd].set(wk.T)
    wv_p = jnp.zeros((F, OP), jnp.float32).at[:, :O].set(wv.T)
    wkv_p = jnp.concatenate([wk_p, wv_p], axis=1)            # (F, HdP+OP)

    compute_dtype = jnp.bfloat16 if use_bf16 else features.dtype
    itemsize = jnp.dtype(compute_dtype).itemsize
    h = features.astype(compute_dtype)
    wq_p = wq_p.astype(compute_dtype)
    wkv_p = wkv_p.astype(compute_dtype)

    vmem_limit = _vmem_limit_bytes()

    # ---- Pass 1: fused K|V projection, once per (b, kv-tile). -------------------
    TP = _pick_tile(S, proj_tile)
    n_proj = S // TP
    proj_cost = pl.CostEstimate(
        flops=2 * B * S * F * KVW,
        transcendentals=0,
        bytes_accessed=(B * S * F * itemsize + F * KVW * itemsize
                        + B * S * KVW * itemsize),
    )
    kv_proj = pl.pallas_call(
        _kv_projection_kernel,
        out_shape=jax.ShapeDtypeStruct((B, S, KVW), compute_dtype),
        grid_spec=pltpu.PrefetchScalarGridSpec(
            num_scalar_prefetch=0,
            grid=(B, n_proj),
            in_specs=[
                pl.BlockSpec((1, TP, F), lambda b, i: (b, i, 0)),     # H
                pl.BlockSpec((F, KVW), lambda b, i: (0, 0)),          # [Wk|Wv] (resident)
            ],
            out_specs=pl.BlockSpec((1, TP, KVW), lambda b, i: (b, i, 0)),
        ),
        compiler_params=pltpu.CompilerParams(
            dimension_semantics=("parallel", "parallel"),
            vmem_limit_bytes=vmem_limit,
        ),
        cost_estimate=proj_cost,
    )(h, wkv_p)

    # ---- Pass 2: flash attention over pre-projected KV tiles. -------------------
    TQ = _pick_tile(S, q_tile)
    TKV = _pick_tile(S, kv_tile)
    nq = S // TQ
    nkv = S // TKV

    kernel = functools.partial(_flash_attention_head_kernel, hd_pad=HdP)
    flash_cost = pl.CostEstimate(
        flops=(2 * B * S * F * HdP           # Q projection (once per q-tile)
               + 2 * B * S * S * HdP         # Q @ K^T
               + 2 * B * S * S * OP),        # P @ V
        transcendentals=B * S * (S + nkv),
        bytes_accessed=(B * S * F * itemsize            # hq (once per q-tile)
                        + B * nq * S * KVW * itemsize   # kv tiles (per q-tile)
                        + F * HdP * itemsize            # Wq
                        + B * S * OP * itemsize),       # output (bf16, padded)
    )

    # Only use deeper KV buffering when the kv axis actually has enough steps.
    kv_buf = kv_buffers if (kv_buffers is not None and nkv >= kv_buffers) else None

    out_padded = pl.pallas_call(
        kernel,
        out_shape=jax.ShapeDtypeStruct((B, S, OP), compute_dtype),
        grid_spec=pltpu.PrefetchScalarGridSpec(
            num_scalar_prefetch=0,
            grid=(B, nq, nkv),
            in_specs=[
                pl.BlockSpec((1, TQ, F), lambda b, qi, ki: (b, qi, 0)),      # H (Q side)
                _block_spec((1, TKV, KVW), lambda b, qi, ki: (b, ki, 0),
                            buffers=kv_buf),                                 # [K|V] tiles
                pl.BlockSpec((F, HdP), lambda b, qi, ki: (0, 0)),            # Wq (resident)
            ],
            out_specs=pl.BlockSpec((1, TQ, OP), lambda b, qi, ki: (b, qi, 0)),
            scratch_shapes=[
                pltpu.VMEM((TQ, HdP), compute_dtype),   # projected q tile
                pltpu.VMEM((TQ, 1), jnp.float32),       # running max
                pltpu.VMEM((TQ, 1), jnp.float32),       # running denom
                pltpu.VMEM((TQ, OP), jnp.float32),      # output accumulator
            ],
        ),
        compiler_params=pltpu.CompilerParams(
            dimension_semantics=("parallel", "parallel", "arbitrary"),
            vmem_limit_bytes=vmem_limit,
        ),
        cost_estimate=flash_cost,
    )(h, kv_proj, wq_p)

    return out_padded[:, :, :O].astype(features.dtype)


def attention_head_reference(features, wk, wq, wv):
    """Pure-JAX f32 reference matching the PyTorch forward."""
    F = features.shape[-1]
    k = features @ wk.T
    q = features @ wq.T
    v = features @ wv.T
    A = (q @ jnp.swapaxes(k, -2, -1)) / (F ** 0.5)
    A = jax.nn.softmax(A, axis=-1)
    return A @ v


if __name__ == "__main__":
    # Small shapes consistent with the module: batch=2, seq=8, feature=32,
    # hidden=32, output=32.
    B, S, F = 2, 8, 32
    hidden_dim, output_size = 32, 32

    key = jax.random.PRNGKey(0)
    k_x, k_wk, k_wq, k_wv = jax.random.split(key, 4)

    features = jax.random.normal(k_x, (B, S, F), dtype=jnp.float32)
    # PyTorch Linear weight layout: (out, in).
    wk = jax.random.normal(k_wk, (hidden_dim, F), dtype=jnp.float32) * 0.1
    wq = jax.random.normal(k_wq, (hidden_dim, F), dtype=jnp.float32) * 0.1
    wv = jax.random.normal(k_wv, (output_size, F), dtype=jnp.float32) * 0.1

    attn = jax.jit(attention_head_pallas)
    out = jax.block_until_ready(attn(features, wk, wq, wv))

    ref = attention_head_reference(features, wk, wq, wv)
    assert out.shape == ref.shape == (B, S, output_size)
    # bf16 MXU operands / bf16 output with f32 accumulation -> relaxed tolerance.
    max_err = jnp.max(jnp.abs(out - ref))
    assert jnp.allclose(out, ref, atol=3e-2, rtol=3e-2), (
        f"mismatch vs reference (max abs err {max_err})")

    print("KERNEL_OK")
</pallas_src>

<mosaic_0001>
module attributes {stable_mosaic.version = 11 : i64} {
  func.func @_flash_attention_head_kernel(%arg0: i32, %arg1: i32, %arg2: i32, %arg3: memref<1x8x32xbf16, #tpu.memory_space<vmem>>, %arg4: memref<1x8x256xbf16, #tpu.memory_space<vmem>>, %arg5: memref<32x128xbf16, #tpu.memory_space<vmem>>, %arg6: memref<1x8x128xbf16, #tpu.memory_space<vmem>>, %arg7: memref<8x128xbf16, #tpu.memory_space<vmem>>, %arg8: memref<8x1xf32, #tpu.memory_space<vmem>>, %arg9: memref<8x1xf32, #tpu.memory_space<vmem>>, %arg10: memref<8x128xf32, #tpu.memory_space<vmem>>) attributes {dimension_semantics = [#tpu.dimension_semantics<parallel>, #tpu.dimension_semantics<parallel>, #tpu.dimension_semantics<arbitrary>], iteration_bounds = array<i64: 2, 1, 1>, scalar_prefetch = 0 : i64, scratch_operands = 4 : i64, tpu.core_type = #tpu.core_type<tc>, window_params = [{transform_indices = @transform_0, window_bounds = array<i64: 1, 8, 32>}, {transform_indices = @transform_1, window_bounds = array<i64: 1, 8, 256>}, {pipeline_mode = #tpu.pipeline_mode<synchronous>, transform_indices = @transform_2, window_bounds = array<i64: 32, 128>}, {transform_indices = @transform_3, window_bounds = array<i64: 1, 8, 128>}]} {
    %c0_i32 = arith.constant 0 : i32
    %0 = arith.cmpi eq, %arg2, %c0_i32 : i32
    %1 = arith.extui %0 : i1 to i32
    %c0_i32_0 = arith.constant 0 : i32
    %2 = arith.cmpi ne, %1, %c0_i32_0 : i32
    scf.if %2 {
      %c0_22 = arith.constant 0 : index
      %c0_23 = arith.constant 0 : index
      %c0_24 = arith.constant 0 : index
      %35 = vector.load %arg3[%c0_22, %c0_23, %c0_24] : memref<1x8x32xbf16, #tpu.memory_space<vmem>>, vector<1x8x32xbf16>
      %36 = vector.shape_cast %35 : vector<1x8x32xbf16> to vector<8x32xbf16>
      %c0_25 = arith.constant 0 : index
      %c0_26 = arith.constant 0 : index
      %37 = vector.load %arg5[%c0_25, %c0_26] : memref<32x128xbf16, #tpu.memory_space<vmem>>, vector<32x128xbf16>
      %cst_27 = arith.constant dense<0.000000e+00> : vector<8x128xf32>
      %38 = tpu.matmul %36, %37, %cst_27 {dimension_numbers = #tpu.dot_dimension_numbers<[1], [0], [0], [1], [0, 0, 1, 1], [], []>} : vector<8x32xbf16>, vector<32x128xbf16>, vector<8x128xf32> -> vector<8x128xf32>
      %39 = arith.truncf %38 : vector<8x128xf32> to vector<8x128xbf16>
      %c0_28 = arith.constant 0 : index
      %c0_29 = arith.constant 0 : index
      %40 = vector.load %arg7[%c0_28, %c0_29] : memref<8x128xbf16, #tpu.memory_space<vmem>>, vector<8x128xbf16>
      tpu.vector_store %arg7[%c0_28, %c0_29], %39 {strides = array<i32>} : memref<8x128xbf16, #tpu.memory_space<vmem>>, vector<8x128xbf16>,
      %cst_30 = arith.constant 0xFF800000 : f32
      %41 = vector.broadcast %cst_30 : f32 to vector<8x1xf32>
      %c0_31 = arith.constant 0 : index
      %c0_32 = arith.constant 0 : index
      %42 = vector.load %arg8[%c0_31, %c0_32] : memref<8x1xf32, #tpu.memory_space<vmem>>, vector<8x1xf32>
      tpu.vector_store %arg8[%c0_31, %c0_32], %41 {strides = array<i32>} : memref<8x1xf32, #tpu.memory_space<vmem>>, vector<8x1xf32>,
      %cst_33 = arith.constant 0.000000e+00 : f32
      %43 = vector.broadcast %cst_33 : f32 to vector<8x1xf32>
      %c0_34 = arith.constant 0 : index
      %c0_35 = arith.constant 0 : index
      %44 = vector.load %arg9[%c0_34, %c0_35] : memref<8x1xf32, #tpu.memory_space<vmem>>, vector<8x1xf32>
      tpu.vector_store %arg9[%c0_34, %c0_35], %43 {strides = array<i32>} : memref<8x1xf32, #tpu.memory_space<vmem>>, vector<8x1xf32>,
      %cst_36 = arith.constant 0.000000e+00 : f32
      %45 = vector.broadcast %cst_36 : f32 to vector<8x128xf32>
      %c0_37 = arith.constant 0 : index
      %c0_38 = arith.constant 0 : index
      %46 = vector.load %arg10[%c0_37, %c0_38] : memref<8x128xf32, #tpu.memory_space<vmem>>, vector<8x128xf32>
      tpu.vector_store %arg10[%c0_37, %c0_38], %45 {strides = array<i32>} : memref<8x128xf32, #tpu.memory_space<vmem>>, vector<8x128xf32>,
    } else {
    }
    %c0 = arith.constant 0 : index
    %c0_1 = arith.constant 0 : index
    %c0_2 = arith.constant 0 : index
    %3 = vector.load %arg4[%c0, %c0_1, %c0_2] : memref<1x8x256xbf16, #tpu.memory_space<vmem>>, vector<1x8x256xbf16>
    %4 = vector.shape_cast %3 : vector<1x8x256xbf16> to vector<8x256xbf16>
    %5 = vector.extract_strided_slice %4 {offsets = [0, 0], sizes = [8, 128], strides = [1, 1]} : vector<8x256xbf16> to vector<8x128xbf16>
    %6 = vector.extract_strided_slice %4 {offsets = [0, 128], sizes = [8, 128], strides = [1, 1]} : vector<8x256xbf16> to vector<8x128xbf16>
    %c0_3 = arith.constant 0 : index
    %c0_4 = arith.constant 0 : index
    %7 = vector.load %arg7[%c0_3, %c0_4] : memref<8x128xbf16, #tpu.memory_space<vmem>>, vector<8x128xbf16>
    %cst = arith.constant dense<0.000000e+00> : vector<8x8xf32>
    %8 = tpu.matmul %7, %5, %cst {dimension_numbers = #tpu.dot_dimension_numbers<[1], [1], [0], [0], [0, 0, 1, 0], [], []>} : vector<8x128xbf16>, vector<8x128xbf16>, vector<8x8xf32> -> vector<8x8xf32>
    %c0_5 = arith.constant 0 : index
    %c0_6 = arith.constant 0 : index
    %9 = vector.load %arg8[%c0_5, %c0_6] : memref<8x1xf32, #tpu.memory_space<vmem>>, vector<8x1xf32>
    %cst_7 = arith.constant dense<0xFF800000> : vector<8xf32>
    %10 = vector.multi_reduction <maximumf>, %8, %cst_7 [1] : vector<8x8xf32> to vector<8xf32>
    %11 = vector.shape_cast %10 : vector<8xf32> to vector<8x1xf32>
    %12 = arith.maximumf %9, %11 : vector<8x1xf32>
    %13 = arith.subf %9, %12 : vector<8x1xf32>
    %14 = math.exp %13 : vector<8x1xf32>
    %15 = vector.broadcast %12 : vector<8x1xf32> to vector<8x8xf32>
    %16 = arith.subf %8, %15 : vector<8x8xf32>
    %17 = math.exp %16 : vector<8x8xf32>
    %c0_8 = arith.constant 0 : index
    %c0_9 = arith.constant 0 : index
    %18 = vector.load %arg9[%c0_8, %c0_9] : memref<8x1xf32, #tpu.memory_space<vmem>>, vector<8x1xf32>
    %19 = arith.mulf %14, %18 : vector<8x1xf32>
    %cst_10 = arith.constant dense<0.000000e+00> : vector<8xf32>
    %20 = vector.multi_reduction <add>, %17, %cst_10 [1] : vector<8x8xf32> to vector<8xf32>
    %21 = vector.shape_cast %20 : vector<8xf32> to vector<8x1xf32>
    %22 = arith.addf %19, %21 : vector<8x1xf32>
    %c0_11 = arith.constant 0 : index
    %c0_12 = arith.constant 0 : index
    %23 = vector.load %arg9[%c0_11, %c0_12] : memref<8x1xf32, #tpu.memory_space<vmem>>, vector<8x1xf32>
    tpu.vector_store %arg9[%c0_11, %c0_12], %22 {strides = array<i32>} : memref<8x1xf32, #tpu.memory_space<vmem>>, vector<8x1xf32>,
    %c0_13 = arith.constant 0 : index
    %c0_14 = arith.constant 0 : index
    %24 = vector.load %arg10[%c0_13, %c0_14] : memref<8x128xf32, #tpu.memory_space<vmem>>, vector<8x128xf32>
    %25 = vector.broadcast %14 : vector<8x1xf32> to vector<8x128xf32>
    %26 = arith.mulf %25, %24 : vector<8x128xf32>
    %27 = arith.truncf %17 : vector<8x8xf32> to vector<8x8xbf16>
    %cst_15 = arith.constant dense<0.000000e+00> : vector<8x128xf32>
    %28 = tpu.matmul %27, %6, %cst_15 {dimension_numbers = #tpu.dot_dimension_numbers<[1], [0], [0], [1], [0, 0, 1, 1], [], []>} : vector<8x8xbf16>, vector<8x128xbf16>, vector<8x128xf32> -> vector<8x128xf32>
    %29 = arith.addf %26, %28 : vector<8x128xf32>
    %c0_16 = arith.constant 0 : index
    %c0_17 = arith.constant 0 : index
    %30 = vector.load %arg10[%c0_16, %c0_17] : memref<8x128xf32, #tpu.memory_space<vmem>>, vector<8x128xf32>
    tpu.vector_store %arg10[%c0_16, %c0_17], %29 {strides = array<i32>} : memref<8x128xf32, #tpu.memory_space<vmem>>, vector<8x128xf32>,
    %c0_18 = arith.constant 0 : index
    %c0_19 = arith.constant 0 : index
    %31 = vector.load %arg8[%c0_18, %c0_19] : memref<8x1xf32, #tpu.memory_space<vmem>>, vector<8x1xf32>
    tpu.vector_store %arg8[%c0_18, %c0_19], %12 {strides = array<i32>} : memref<8x1xf32, #tpu.memory_space<vmem>>, vector<8x1xf32>,
    %c0_i32_20 = arith.constant 0 : i32
    %32 = arith.cmpi eq, %arg2, %c0_i32_20 : i32
    %33 = arith.extui %32 : i1 to i32
    %c0_i32_21 = arith.constant 0 : i32
    %34 = arith.cmpi ne, %33, %c0_i32_21 : i32
    scf.if %34 {
      %c0_22 = arith.constant 0 : index
      %c0_23 = arith.constant 0 : index
      %35 = vector.load %arg10[%c0_22, %c0_23] : memref<8x128xf32, #tpu.memory_space<vmem>>, vector<8x128xf32>
      %c0_24 = arith.constant 0 : index
      %c0_25 = arith.constant 0 : index
      %36 = vector.load %arg9[%c0_24, %c0_25] : memref<8x1xf32, #tpu.memory_space<vmem>>, vector<8x1xf32>
      %37 = tpu.reciprocal %36 {approx = true} : vector<8x1xf32> -> vector<8x1xf32>
      %38 = vector.broadcast %37 : vector<8x1xf32> to vector<8x128xf32>
      %39 = arith.mulf %35, %38 : vector<8x128xf32>
      %40 = arith.truncf %39 : vector<8x128xf32> to vector<8x128xbf16>
      %c0_26 = arith.constant 0 : index
      %c0_27 = arith.constant 0 : index
      %c0_28 = arith.constant 0 : index
      %41 = vector.load %arg6[%c0_26, %c0_27, %c0_28] : memref<1x8x128xbf16, #tpu.memory_space<vmem>>, vector<1x8x128xbf16>
      %42 = vector.shape_cast %41 : vector<1x8x128xbf16> to vector<8x128xbf16>
      %43 = vector.shape_cast %40 : vector<8x128xbf16> to vector<1x8x128xbf16>
      tpu.vector_store %arg6[%c0_26, %c0_27, %c0_28], %43 {strides = array<i32>} : memref<1x8x128xbf16, #tpu.memory_space<vmem>>, vector<1x8x128xbf16>,
    } else {
    }
    return
  }
  func.func @transform_0(%arg0: i32, %arg1: i32, %arg2: i32) -> (i32, i32, i32) {
    %c0_i32 = arith.constant 0 : i32
    %c0_i32_0 = arith.constant 0 : i32
    return %arg0, %arg1, %c0_i32 : i32, i32, i32
  }
  func.func @transform_1(%arg0: i32, %arg1: i32, %arg2: i32) -> (i32, i32, i32) {
    %c0_i32 = arith.constant 0 : i32
    %c0_i32_0 = arith.constant 0 : i32
    return %arg0, %arg2, %c0_i32 : i32, i32, i32
  }
  func.func @transform_2(%arg0: i32, %arg1: i32, %arg2: i32) -> (i32, i32) {
    %c0_i32 = arith.constant 0 : i32
    %c0_i32_0 = arith.constant 0 : i32
    %c0_i32_1 = arith.constant 0 : i32
    return %c0_i32, %c0_i32_0 : i32, i32
  }
  func.func @transform_3(%arg0: i32, %arg1: i32, %arg2: i32) -> (i32, i32, i32) {
    %c0_i32 = arith.constant 0 : i32
    %c0_i32_0 = arith.constant 0 : i32
    return %arg0, %arg1, %c0_i32 : i32, i32, i32
  }
}

module attributes {stable_mosaic.version = 11 : i64} {
  func.func @_kv_projection_kernel(%arg0: i32, %arg1: i32, %arg2: memref<1x8x32xbf16, #tpu.memory_space<vmem>>, %arg3: memref<32x256xbf16, #tpu.memory_space<vmem>>, %arg4: memref<1x8x256xbf16, #tpu.memory_space<vmem>>) attributes {dimension_semantics = [#tpu.dimension_semantics<parallel>, #tpu.dimension_semantics<parallel>], iteration_bounds = array<i64: 2, 1>, scalar_prefetch = 0 : i64, scratch_operands = 0 : i64, tpu.core_type = #tpu.core_type<tc>, window_params = [{transform_indices = @transform_0, window_bounds = array<i64: 1, 8, 32>}, {pipeline_mode = #tpu.pipeline_mode<synchronous>, transform_indices = @transform_1, window_bounds = array<i64: 32, 256>}, {transform_indices = @transform_2, window_bounds = array<i64: 1, 8, 256>}]} {
    %c0 = arith.constant 0 : index
    %c0_0 = arith.constant 0 : index
    %c0_1 = arith.constant 0 : index
    %0 = vector.load %arg2[%c0, %c0_0, %c0_1] : memref<1x8x32xbf16, #tpu.memory_space<vmem>>, vector<1x8x32xbf16>
    %1 = vector.shape_cast %0 : vector<1x8x32xbf16> to vector<8x32xbf16>
    %c0_2 = arith.constant 0 : index
    %c0_3 = arith.constant 0 : index
    %2 = vector.load %arg3[%c0_2, %c0_3] : memref<32x256xbf16, #tpu.memory_space<vmem>>, vector<32x256xbf16>
    %cst = arith.constant dense<0.000000e+00> : vector<8x256xf32>
    %3 = tpu.matmul %1, %2, %cst {dimension_numbers = #tpu.dot_dimension_numbers<[1], [0], [0], [1], [0, 0, 1, 1], [], []>} : vector<8x32xbf16>, vector<32x256xbf16>, vector<8x256xf32> -> vector<8x256xf32>
    %4 = arith.truncf %3 : vector<8x256xf32> to vector<8x256xbf16>
    %c0_4 = arith.constant 0 : index
    %c0_5 = arith.constant 0 : index
    %c0_6 = arith.constant 0 : index
    %5 = vector.load %arg4[%c0_4, %c0_5, %c0_6] : memref<1x8x256xbf16, #tpu.memory_space<vmem>>, vector<1x8x256xbf16>
    %6 = vector.shape_cast %5 : vector<1x8x256xbf16> to vector<8x256xbf16>
    %7 = vector.shape_cast %4 : vector<8x256xbf16> to vector<1x8x256xbf16>
    tpu.vector_store %arg4[%c0_4, %c0_5, %c0_6], %7 {strides = array<i32>} : memref<1x8x256xbf16, #tpu.memory_space<vmem>>, vector<1x8x256xbf16>,
    return
  }
  func.func @transform_0(%arg0: i32, %arg1: i32) -> (i32, i32, i32) {
    %c0_i32 = arith.constant 0 : i32
    %c0_i32_0 = arith.constant 0 : i32
    return %arg0, %arg1, %c0_i32 : i32, i32, i32
  }
  func.func @transform_1(%arg0: i32, %arg1: i32) -> (i32, i32) {
    %c0_i32 = arith.constant 0 : i32
    %c0_i32_0 = arith.constant 0 : i32
    %c0_i32_1 = arith.constant 0 : i32
    return %c0_i32, %c0_i32_0 : i32, i32
  }
  func.func @transform_2(%arg0: i32, %arg1: i32) -> (i32, i32, i32) {
    %c0_i32 = arith.constant 0 : i32
    %c0_i32_0 = arith.constant 0 : i32
    return %arg0, %arg1, %c0_i32 : i32, i32, i32
  }
}

</mosaic_0001>

<llo_original>
// kernel: attention_head_pallas.3
$region0: #{attention_head_pallas.3}
  #allocation0 [shape = 'u32[]', space=smem, size = 0x4, offset = 0x4, fixed_abs, tag = 'smem constant byte address 0x4 - core index']
  #allocation1 [shape = 'u32[144,128]{1,0:T(1,128)}', space=vmem, size = 0x12000, scoped, tag = 'internal scratch']
  #allocation2 [shape = 'bf16[8,128]{1,0:T(8,128)(2,1)}', space=vmem, size = 0x800, scoped, tag = 'scratch operand']
  #allocation3 [shape = 'f32[8,1]{1,0:T(8,128)}', space=vmem, size = 0x1000, scoped, tag = 'scratch operand']
  #allocation4 [shape = 'f32[8,1]{1,0:T(8,128)}', space=vmem, size = 0x1000, scoped, tag = 'scratch operand']
  #allocation5 [shape = 'f32[8,128]{1,0:T(8,128)}', space=vmem, size = 0x1000, scoped, tag = 'scratch operand']
  %s0 = inlined_call_operand.hbm [shape: bf16[2,8,32], index: 0, kind: input, shape index: {}]
  %s1 = inlined_call_operand.hbm [shape: bf16[2,8,256], index: 1, kind: input, shape index: {}]
  %s2 = inlined_call_operand.hbm [shape: bf16[32,128], index: 2, kind: input, shape index: {}]
  %s3 = inlined_call_operand.hbm [shape: bf16[2,8,128], index: 3, kind: output, shape index: {}]
  %s4 = sld [smem:[#allocation0]]
  $region65: #{attention_head_pallas.3} parent=0
    _
  %s6 = ssub.s32 1, %s4
  %s7 = scalar_select 0, %s6, %s4
  $region1: #{attention_head_pallas.3} parent=0
    #allocation6 [shape = 'u8[4096]{0}', space=vmem, size = 0x1000, scoped, tag = 'input window, operand 0']
    #allocation7 [shape = 's32[2]{0}', space=sflag, size = 0x8, scoped, tag = 'scoped memory for attention_head_pallas.3']
    #allocation8 [shape = 's32[2]{0}', space=sflag, size = 0x8, scoped, tag = 'scoped memory for attention_head_pallas.3']
    #allocation9 [shape = 'u8[8192]{0}', space=vmem, size = 0x2000, scoped, tag = 'input window, operand 1']
    #allocation10 [shape = 's32[2]{0}', space=sflag, size = 0x8, scoped, tag = 'scoped memory for attention_head_pallas.3']
    #allocation11 [shape = 'u8[8192]{0}', space=vmem, size = 0x2000, scoped, tag = 'input window, operand 2, single buffered']
    #allocation12 [shape = 'u8[4096]{0}', space=vmem, size = 0x1000, scoped, tag = 'output window, operand 0']
    %8 = vsyncpa [#allocation7], 0
    %s9 = scalar_lea.sflag [#allocation7], 1
    %10 = vsyncpa %s9, 0
    %11 = vsyncpa [#allocation10], 0
    %s12 = scalar_lea.sflag [#allocation10], 1
    %13 = vsyncpa %s12, 0
    %14 = vsyncpa [#allocation8], 0
    %s15 = scalar_lea.sflag [#allocation8], 1
    %16 = vsyncpa %s15, 0
    loop: start=0, step=1, limit=4
    $region2: #{attention_head_pallas.3} parent=1 // loop_pre_header
      _
    $region3: #{attention_head_pallas.3} parent=1 // loop_header
      %s18 = sphi 0, %s22
      %p19 = scmp.ge.s32.totalorder %s18, 4
      %s25 = sphi 0, %s44
      %s26 = sphi 0, %s40
      %s27 = sphi 0, %s36
      %s28 = sphi 0, %s25
      %s29 = sphi 0, %s26
      %s30 = sphi 0, %s27
      %s31 = sphi 0, %s28
      %s32 = sphi 0, %s29
      %s33 = sphi 0, %s30
      %s49 = sphi 0, %s51
      %s52 = sphi 0, %s49
      %s53 = sphi 0, %s52
      %s69 = sphi 0, %s53
      %s77 = sphi 0, %s79
      %s80 = sphi 0, %s77
      %s81 = sphi 0, %s80
      %s97 = sphi 0, %s81
      %s101 = sphi 0, %s101
      %s103 = sphi 0, %s101
      %s104 = sphi 0, %s103
      %s118 = sphi 0, %s104
      %s126 = sphi 0, %s128
      %s129 = sphi 0, %s126
      %s130 = sphi 0, %s129
      %s146 = sphi 0, %s130
    $region4: #{attention_head_pallas.3} parent=1 // loop_header_branch
      %21 = sbr.rel (%p19) target = $region8
    $region5: #{attention_head_pallas.3} parent=1 // loop_body
      %s23 = ssub.s32 %s18, 1
      %s24 = ssub.s32 %s18, 2
      %s34 = sadd.s32 1, %s27
      %p35 = scmp.ge.s32.totalorder %s34, 1
      %s36 = scalar_select %p35, 0, %s34
      %s37 = sadd.s32 1, %s26
      %s38 = scalar_select %p35, %s37, %s26
      %p39 = scmp.ge.s32.totalorder %s38, 1
      %s40 = scalar_select %p39, 0, %s38
      %s41 = sadd.s32 1, %s25
      %s42 = scalar_select %p39, %s41, %s25
      %p43 = scmp.ge.s32.totalorder %s42, 2
      %s44 = scalar_select %p43, 0, %s42
      %s45 = ssub.s32 %s25, %s44
      %s46 = ssub.s32 %s26, %s40
      %s47 = sor.u32 %s45, %s46
      %p48 = scmp.eq.s32.totalorder %s47, 0
      %s50 = sadd.s32 %s49, 1
      %s51 = scalar_select %p48, %s49, %s50
      %p54 = pneg %p48
      %p55 = scmp.eq.s32.totalorder %s18, 1
      %p56 = por %p54, %p55
      %p57 = scmp.ne.s32.totalorder %s49, %s52
      %p58 = scmp.eq.s32.totalorder %s18, 0
      %p59 = por %p57, %p58
      %p60 = scmp.ne.s32.totalorder %s49, %s52
      %p61 = scmp.eq.s32.totalorder %s23, 1
      %p62 = por %p60, %p61
      %p63 = scmp.ne.s32.totalorder %s52, %s53
      %p64 = scmp.eq.s32.totalorder %s23, 0
      %p65 = por %p63, %p64
      %p66 = scmp.ne.s32.totalorder %s52, %s53
      %p67 = scmp.eq.s32.totalorder %s24, 1
      %p68 = por %p66, %p67
      %p70 = scmp.ne.s32.totalorder %s53, %s69
      %p71 = scmp.eq.s32.totalorder %s24, 0
      %p72 = por %p70, %p71
      %s73 = ssub.s32 %s25, %s44
      %s74 = ssub.s32 %s27, %s36
      %s75 = sor.u32 %s73, %s74
      %p76 = scmp.eq.s32.totalorder %s75, 0
      %s78 = sadd.s32 %s77, 1
      %s79 = scalar_select %p76, %s77, %s78
      %p82 = pneg %p76
      %p83 = scmp.eq.s32.totalorder %s18, 1
      %p84 = por %p82, %p83
      %p85 = scmp.ne.s32.totalorder %s77, %s80
      %p86 = scmp.eq.s32.totalorder %s18, 0
      %p87 = por %p85, %p86
      %p88 = scmp.ne.s32.totalorder %s77, %s80
      %p89 = scmp.eq.s32.totalorder %s23, 1
      %p90 = por %p88, %p89
      %p91 = scmp.ne.s32.totalorder %s80, %s81
      %p92 = scmp.eq.s32.totalorder %s23, 0
      %p93 = por %p91, %p92
      %p94 = scmp.ne.s32.totalorder %s80, %s81
      %p95 = scmp.eq.s32.totalorder %s24, 1
      %p96 = por %p94, %p95
      %p98 = scmp.ne.s32.totalorder %s81, %s97
      %p99 = scmp.eq.s32.totalorder %s24, 0
      %p100 = por %p98, %p99
      %s102 = sadd.s32 %s101, 1
      %p105 = scmp.eq.s32.totalorder %s18, 1
      %p106 = scmp.ne.s32.totalorder %s101, %s103
      %p107 = scmp.eq.s32.totalorder %s18, 0
      %p108 = por %p106, %p107
      %p109 = scmp.ne.s32.totalorder %s101, %s103
      %p110 = scmp.eq.s32.totalorder %s23, 1
      %p111 = por %p109, %p110
      %p112 = scmp.ne.s32.totalorder %s103, %s104
      %p113 = scmp.eq.s32.totalorder %s23, 0
      %p114 = por %p112, %p113
      %p115 = scmp.ne.s32.totalorder %s103, %s104
      %p116 = scmp.eq.s32.totalorder %s24, 1
      %p117 = por %p115, %p116
      %p119 = scmp.ne.s32.totalorder %s104, %s118
      %p120 = scmp.eq.s32.totalorder %s24, 0
      %p121 = por %p119, %p120
      %s122 = ssub.s32 %s25, %s44
      %s123 = ssub.s32 %s26, %s40
      %s124 = sor.u32 %s122, %s123
      %p125 = scmp.eq.s32.totalorder %s124, 0
      %s127 = sadd.s32 %s126, 1
      %s128 = scalar_select %p125, %s126, %s127
      %p131 = pneg %p125
      %p132 = scmp.eq.s32.totalorder %s18, 1
      %p133 = por %p131, %p132
      %p134 = scmp.ne.s32.totalorder %s126, %s129
      %p135 = scmp.eq.s32.totalorder %s18, 0
      %p136 = por %p134, %p135
      %p137 = scmp.ne.s32.totalorder %s126, %s129
      %p138 = scmp.eq.s32.totalorder %s23, 1
      %p139 = por %p137, %p138
      %p140 = scmp.ne.s32.totalorder %s129, %s130
      %p141 = scmp.eq.s32.totalorder %s23, 0
      %p142 = por %p140, %p141
      %p143 = scmp.ne.s32.totalorder %s129, %s130
      %p144 = scmp.eq.s32.totalorder %s24, 1
      %p145 = por %p143, %p144
      %p147 = scmp.ne.s32.totalorder %s130, %s146
      %p148 = scmp.eq.s32.totalorder %s24, 0
      %p149 = por %p147, %p148
      %p150 = scmp.le.s32.totalorder 1, %s18
      %p151 = scmp.lt.s32.totalorder %s18, 3
      %p152 = pnand %p150, %p151
      %p153 = pneg %p152
      // Predicated region
      $region9: #{attention_head_pallas.3} parent=5 // pred_check
        _
      $region10: #{attention_head_pallas.3} parent=5 // pred_check_branch
        %155 = sbr.rel (%p152) target = $region12
      $region11: #{attention_head_pallas.3} parent=5 // pred_region
        %s156 = ssub.s32 %s18, 1
        // Predicated region
        $region13: #{attention_head_pallas.3} parent=11 // pred_check
          %p157 = pneg %p114
        $region14: #{attention_head_pallas.3} parent=11 // pred_check_branch
          %159 = sbr.rel (%p157) target = $region16
        $region15: #{attention_head_pallas.3} parent=11 // pred_region
          %s161 = ssub.s32 256, 256
          %162 = vsyncadd [#allocation10], %s161
          %s163 = sshll.u32 [#allocation11], 4
          %s164 = int_to_ptr.vmem [resolvable:$true] %s163
          %169 = dma.hbm_to_vmem [thread:$0]  %s2, 256, %s164, [#allocation10], 64, 64, 4
        $region16: #{attention_head_pallas.3} parent=11 // pred_fallthru
          _
      $region12: #{attention_head_pallas.3} parent=5 // pred_fallthru
        _
      %p170 = scmp.lt.s32.totalorder %s18, 2
      // Predicated region
      $region17: #{attention_head_pallas.3} parent=5 // pred_check
        %p171 = pneg %p170
      $region18: #{attention_head_pallas.3} parent=5 // pred_check_branch
        %173 = sbr.rel (%p171) target = $region20
      $region19: #{attention_head_pallas.3} parent=5 // pred_region
        // Predicated region
        $region21: #{attention_head_pallas.3} parent=19 // pred_check
          %p174 = pneg %p59
        $region22: #{attention_head_pallas.3} parent=19 // pred_check_branch
          %176 = sbr.rel (%p174) target = $region24
        $region23: #{attention_head_pallas.3} parent=19 // pred_region
          %s177 = sand.u32 %s49, 1
          %s178 = scalar_lea.sflag [#allocation7], %s177
          %s179 = sand.u32 %s49, 1
          %s180 = smul.addr %s179, 4
          %s181 = scalar_lea.vmem [#allocation6], %s180
          %s183 = ssub.s32 64, 64
          %184 = vsyncadd %s178, %s183
          %s185 = sadd.s32 %s26, %s25
          %s186 = smul.addr %s185, 64
          %s187 = scalar_lea.hbm %s0, %s186
          %s189 = sshll.u32 %s181, 4
          %s190 = int_to_ptr.vmem [resolvable:$true] %s189
          %192 = dma.hbm_to_vmem [thread:$0]  %s187, 64, %s190, %s178
        $region24: #{attention_head_pallas.3} parent=19 // pred_fallthru
          _
        // Predicated region
        $region25: #{attention_head_pallas.3} parent=19 // pred_check
          %p193 = pneg %p87
        $region26: #{attention_head_pallas.3} parent=19 // pred_check_branch
          %195 = sbr.rel (%p193) target = $region28
        $region27: #{attention_head_pallas.3} parent=19 // pred_region
          %s196 = sand.u32 %s18, 1
          %s197 = scalar_lea.sflag [#allocation10], %s196
          %s198 = sand.u32 %s77, 1
          %s199 = smul.addr %s198, 8
          %s200 = scalar_lea.vmem [#allocation9], %s199
          %s202 = ssub.s32 128, 128
          %203 = vsyncadd %s197, %s202
          %s204 = smul.addr %s27, 2
          %s205 = smul.addr %s25, 2
          %s206 = sadd.s32 %s204, %s205
          %s207 = smul.addr %s206, 64
          %s208 = scalar_lea.hbm %s1, %s207
          %s210 = sshll.u32 %s200, 4
          %s211 = int_to_ptr.vmem [resolvable:$true] %s210
          %213 = dma.hbm_to_vmem [thread:$0]  %s208, 128, %s211, %s197
        $region28: #{attention_head_pallas.3} parent=19 // pred_fallthru
          _
      $region20: #{attention_head_pallas.3} parent=5 // pred_fallthru
        _
      %p214 = scmp.le.s32.totalorder 1, %s18
      %p215 = scmp.lt.s32.totalorder %s18, 3
      %p216 = pnand %p214, %p215
      %p217 = pneg %p216
      // Predicated region
      $region29: #{attention_head_pallas.3} parent=5 // pred_check
        _
      $region30: #{attention_head_pallas.3} parent=5 // pred_check_branch
        %219 = sbr.rel (%p216) target = $region32
      $region31: #{attention_head_pallas.3} parent=5 // pred_region
        %s220 = ssub.s32 %s18, 1
        %s221 = sand.u32 %s52, 1
        %s222 = scalar_lea.sflag [#allocation7], %s221
        %s223 = sand.u32 %s52, 1
        %s224 = smul.addr %s223, 4
        %s225 = scalar_lea.vmem [#allocation6], %s224
        // Predicated region
        $region33: #{attention_head_pallas.3} parent=31 // pred_check
          %p226 = pneg %p65
        $region34: #{attention_head_pallas.3} parent=31 // pred_check_branch
          %228 = sbr.rel (%p226) target = $region36
        $region35: #{attention_head_pallas.3} parent=31 // pred_region
          %229 = dma.done %s222, 64
        $region36: #{attention_head_pallas.3} parent=31 // pred_fallthru
          _
        %s230 = sand.u32 %s23, 1
        %s231 = scalar_lea.sflag [#allocation10], %s230
        %s232 = sand.u32 %s80, 1
        %s233 = smul.addr %s232, 8
        %s234 = scalar_lea.vmem [#allocation9], %s233
        // Predicated region
        $region37: #{attention_head_pallas.3} parent=31 // pred_check
          %p235 = pneg %p93
        $region38: #{attention_head_pallas.3} parent=31 // pred_check_branch
          %237 = sbr.rel (%p235) target = $region40
        $region39: #{attention_head_pallas.3} parent=31 // pred_region
          %238 = dma.done %s231, 128
        $region40: #{attention_head_pallas.3} parent=31 // pred_fallthru
          _
        // Predicated region
        $region41: #{attention_head_pallas.3} parent=31 // pred_check
          %p239 = pneg %p114
        $region42: #{attention_head_pallas.3} parent=31 // pred_check_branch
          %241 = sbr.rel (%p239) target = $region44
        $region43: #{attention_head_pallas.3} parent=31 // pred_region
          %242 = dma.done [#allocation10], 256
        $region44: #{attention_head_pallas.3} parent=31 // pred_fallthru
          _
        %s243 = sand.u32 %s52, 1
        %s244 = scalar_lea.sflag [#allocation7], %s243
        %s245 = sand.u32 %s52, 1
        %s246 = smul.addr %s245, 4
        %s247 = scalar_lea.vmem [#allocation6], %s246
        %p248 = pneg %p65
        %p249 = pneg %p62
        %s250 = sand.u32 %s23, 1
        %s251 = scalar_lea.sflag [#allocation10], %s250
        %s252 = sand.u32 %s80, 1
        %s253 = smul.addr %s252, 8
        %s254 = scalar_lea.vmem [#allocation9], %s253
        %p255 = pneg %p93
        %p256 = pneg %p90
        %p257 = pneg %p114
        %p258 = pneg %p111
        %p259 = pneg %p142
        %p260 = pneg %p139
        %s261 = sand.u32 %s129, 1
        %s262 = scalar_lea.sflag [#allocation8], %s261
        %s263 = sand.u32 %s129, 1
        %s264 = smul.addr %s263, 4
        %s265 = scalar_lea.vmem [#allocation12], %s264
        %p267 = scmp.eq.s32.totalorder %s30, 0
        // Predicated region
        $region45: #{attention_head_pallas.3} parent=31 // pred_check
          %p268 = pneg %p267
        $region46: #{attention_head_pallas.3} parent=31 // pred_check_branch
          %270 = sbr.rel (%p268) target = $region48
        $region47: #{attention_head_pallas.3} parent=31 // pred_region
          %v271 = vld [vmem:[%s225] sm:$0xf]
          %v272 = vld [vmem:[#allocation11] sm:$0xf]
          %v273 = vld [vmem:[#allocation11 + $0x4] sm:$0xf]
          %v274 = vld [vmem:[#allocation11 + $0x8] sm:$0xf]
          %v275 = vld [vmem:[#allocation11 + $0xc] sm:$0xf]
          %v280 = vunpack.c.l.b16 %v272
          %v281 = vunpack.c.l.b16 %v273
          %v282 = vunpack.c.l.b16 %v274
          %v283 = vunpack.c.l.b16 %v275
          %v284 = vpack.c.b16 %v281, %v280
          %v285 = vpack.c.b16 %v283, %v282
          %vm288 = vcmask 261120
          %v290 = vsel %vm288, %v271, 0
          %292 = vmatprep.subr.bf16.mxu0 0
          %293 = vmatpush1.bf16.msra.mxu0 %v284
          %294 = vmatprep.subr.bf16.mxu0 0
          %295 = vmatpush1.bf16.msra.mxu0 %v285
          %296 = vmatprep.subr.bf16.mxu0 0
          %297 = vmatpush1.bf16.msra.mxu0 0
          %298 = vmatprep.subr.bf16.mxu0 0
          %299 = vmatpush1.bf16.msra.mxu0 0
          %300 = vmatprep.subr.bf16.mxu0 0
          %301 = vmatpush1.bf16.msra.mxu0 0
          %302 = vmatprep.subr.bf16.mxu0 0
          %303 = vmatpush1.bf16.msra.mxu0 0
          %304 = vmatprep.subr.bf16.mxu0 0
          %305 = vmatpush1.bf16.msra.mxu0 0
          %306 = vmatprep.subr.bf16.mxu0 0
          %307 = vmatpush1.bf16.msra.mxu0 0
          %308 = vmatprep.subr.bf16.mxu0 0
          %309 = vmatpush1.bf16.msra.mxu0 0
          %310 = vmatprep.subr.bf16.mxu0 0
          %311 = vmatpush1.bf16.msra.mxu0 0
          %312 = vmatprep.subr.bf16.mxu0 0
          %313 = vmatpush1.bf16.msra.mxu0 0
          %314 = vmatprep.subr.bf16.mxu0 0
          %315 = vmatpush1.bf16.msra.mxu0 0
          %316 = vmatprep.subr.bf16.mxu0 0
          %317 = vmatpush1.bf16.msra.mxu0 0
          %318 = vmatprep.subr.bf16.mxu0 0
          %319 = vmatpush1.bf16.msra.mxu0 0
          %320 = vmatprep.subr.bf16.mxu0 0
          %321 = vmatpush1.bf16.msra.mxu0 0
          %322 = vmatprep.subr.bf16.mxu0 0
          %323 = vmatpush1.bf16.msra.mxu0 0
          %324 = vmatprep.mubr.bf16.mxu0 0
          %325 = vmatmul.mubr.bf16.gmra.mrb[0].mxu0 %v290
          %v326 = vpop.f32.mrb[0].mxu0
          %v327 = vadd.f32 0.0, %v326
          %v328 = vpop.f32.mrb[0].mxu0
          %v329 = vpop.f32.mrb[0].mxu0
          %v330 = vpop.f32.mrb[0].mxu0
          %331 = vdwg.mxu0
          %v332 = vpack.c.bf16 %v327, %v327
          %333 = vst [vmem:[#allocation2] sm:$0xf] %v332
          %vm334 = vcmask 7168
          %335 = vst.msk [vmem:[#allocation3] sm:$0xff] %vm334, -inf
          %336 = vst.msk [vmem:[#allocation4] sm:$0xff] %vm334, 0.0
          %337 = vst [vmem:[#allocation5] sm:$0xff] 0.0
        $region48: #{attention_head_pallas.3} parent=31 // pred_fallthru
          _
        %v338 = vld [vmem:[%s234] sm:$0xff]
        %v339 = vld [vmem:[#allocation2] sm:$0xf]
        %340 = vmatprep.subr.bf16.mxu0 0
        %341 = vmatpush1.bf16.xpose.msra.mxu0 %v338
        %342 = vmatprep.subr.bf16.mxu0 0
        %343 = vmatpush1.bf16.xpose.msra.mxu0 0
        %344 = vmatprep.subr.bf16.mxu0 0
        %345 = vmatpush1.bf16.xpose.msra.mxu0 0
        %346 = vmatprep.subr.bf16.mxu0 0
        %347 = vmatpush1.bf16.xpose.msra.mxu0 0
        %348 = vmatprep.subr.bf16.mxu0 0
        %349 = vmatpush1.bf16.xpose.msra.mxu0 0
        %350 = vmatprep.subr.bf16.mxu0 0
        %351 = vmatpush1.bf16.xpose.msra.mxu0 0
        %352 = vmatprep.subr.bf16.mxu0 0
        %353 = vmatpush1.bf16.xpose.msra.mxu0 0
        %354 = vmatprep.subr.bf16.mxu0 0
        %355 = vmatpush1.bf16.xpose.msra.mxu0 0
        %356 = vmatprep.subr.bf16.mxu0 0
        %357 = vmatpush1.bf16.xpose.msra.mxu0 0
        %358 = vmatprep.subr.bf16.mxu0 0
        %359 = vmatpush1.bf16.xpose.msra.mxu0 0
        %360 = vmatprep.subr.bf16.mxu0 0
        %361 = vmatpush1.bf16.xpose.msra.mxu0 0
        %362 = vmatprep.subr.bf16.mxu0 0
        %363 = vmatpush1.bf16.xpose.msra.mxu0 0
        %364 = vmatprep.subr.bf16.mxu0 0
        %365 = vmatpush1.bf16.xpose.msra.mxu0 0
        %366 = vmatprep.subr.bf16.mxu0 0
        %367 = vmatpush1.bf16.xpose.msra.mxu0 0
        %368 = vmatprep.subr.bf16.mxu0 0
        %369 = vmatpush1.bf16.xpose.msra.mxu0 0
        %370 = vmatprep.subr.bf16.mxu0 0
        %371 = vmatpush1.bf16.xpose.msra.mxu0 0
        %372 = vmatprep.mubr.bf16.mxu0 0
        %373 = vmatmul.mubr.bf16.gmra.mrb[0].mxu0 %v339
        %v374 = vpop.f32.mrb[0].mxu0
        %v375 = vadd.f32 0.0, %v374
        %v376 = vpop.f32.mrb[0].mxu0
        %v377 = vpop.f32.mrb[0].mxu0
        %v378 = vpop.f32.mrb[0].mxu0
        %379 = vdwg.mxu0
        %v380 = vld [vmem:[#allocation3] sm:$0xff]
        %vm381 = vcmask 64512
        %v382 = vsel %vm381, %v375, -inf
        %383 = vmax.xlane.f32.xlu0 %v382
        %v384 = vpop.xlane.xlu0 %383
        %v385 = vmax.f32 %v380, %v384
        %v386 = vsub.f32 %v380, %v385
        %v387 = vmul.f32 %v386, 1.442695
        %v388 = vpow.pop %v387
        %390 = vset.pattern.permute.xlu0 0
        %391 = vperm.xlu0 %390, %v385
        %v392 = vpop.permute.xlu0 %391
        %v394 = vsub.f32 %v375, %v392
        %v395 = vmul.f32 %v394, 1.442695
        %v396 = vpow.pop %v395
        %v397 = vld [vmem:[#allocation4] sm:$0xff]
        %v398 = vmul.f32 %v388, %v397
        %v399 = vsel %vm381, %v396, 0.0
        %400 = vadd.xlane.f32.xlu0 %v399
        %v401 = vpop.xlane.xlu0 %400
        %v402 = vadd.f32 %v398, %v401
        %vm403 = vcmask 7168
        %404 = vst.msk [vmem:[#allocation4] sm:$0xff] %vm403, %v402
        %v405 = vld [vmem:[#allocation5] sm:$0xff]
        %407 = vset.pattern.permute.xlu0 0
        %408 = vperm.xlu0 %407, %v388
        %v409 = vpop.permute.xlu0 %408
        %v411 = vmul.f32 %v409, %v405
        %v412 = vpack.c.bf16 %v396, %v396
        %v414 = vunpack.c.h.b16 %v338
        %v415 = vpack.c.b16 %v414, %v414
        %v417 = vsel %vm381, %v412, 0
        %vm419 = vcmask 1043456
        %v421 = vsel %vm419, %v415, 0
        %423 = vmatprep.subr.bf16.mxu0 0
        %424 = vmatpush1.bf16.msra.mxu0 %v421
        %425 = vmatprep.subr.bf16.mxu0 0
        %426 = vmatpush1.bf16.msra.mxu0 0
        %427 = vmatprep.subr.bf16.mxu0 0
        %428 = vmatpush1.bf16.msra.mxu0 0
        %429 = vmatprep.subr.bf16.mxu0 0
        %430 = vmatpush1.bf16.msra.mxu0 0
        %431 = vmatprep.subr.bf16.mxu0 0
        %432 = vmatpush1.bf16.msra.mxu0 0
        %433 = vmatprep.subr.bf16.mxu0 0
        %434 = vmatpush1.bf16.msra.mxu0 0
        %435 = vmatprep.subr.bf16.mxu0 0
        %436 = vmatpush1.bf16.msra.mxu0 0
        %437 = vmatprep.subr.bf16.mxu0 0
        %438 = vmatpush1.bf16.msra.mxu0 0
        %439 = vmatprep.subr.bf16.mxu0 0
        %440 = vmatpush1.bf16.msra.mxu0 0
        %441 = vmatprep.subr.bf16.mxu0 0
        %442 = vmatpush1.bf16.msra.mxu0 0
        %443 = vmatprep.subr.bf16.mxu0 0
        %444 = vmatpush1.bf16.msra.mxu0 0
        %445 = vmatprep.subr.bf16.mxu0 0
        %446 = vmatpush1.bf16.msra.mxu0 0
        %447 = vmatprep.subr.bf16.mxu0 0
        %448 = vmatpush1.bf16.msra.mxu0 0
        %449 = vmatprep.subr.bf16.mxu0 0
        %450 = vmatpush1.bf16.msra.mxu0 0
        %451 = vmatprep.subr.bf16.mxu0 0
        %452 = vmatpush1.bf16.msra.mxu0 0
        %453 = vmatprep.subr.bf16.mxu0 0
        %454 = vmatpush1.bf16.msra.mxu0 0
        %455 = vmatprep.mubr.bf16.mxu0 0
        %456 = vmatmul.mubr.bf16.gmra.mrb[0].mxu0 %v417
        %v457 = vpop.f32.mrb[0].mxu0
        %v458 = vadd.f32 0.0, %v457
        %v459 = vpop.f32.mrb[0].mxu0
        %v460 = vpop.f32.mrb[0].mxu0
        %v461 = vpop.f32.mrb[0].mxu0
        %462 = vdwg.mxu0
        %v463 = vadd.f32 %v411, %v458
        %464 = vst [vmem:[#allocation5] sm:$0xff] %v463
        %465 = vst.msk [vmem:[#allocation3] sm:$0xff] %vm403, %v385
        // Predicated region
        $region49: #{attention_head_pallas.3} parent=31 // pred_check
          %p466 = pneg %p267
        $region50: #{attention_head_pallas.3} parent=31 // pred_check_branch
          %468 = sbr.rel (%p466) target = $region52
        $region51: #{attention_head_pallas.3} parent=31 // pred_region
          %v469 = vld [vmem:[#allocation5] sm:$0xff]
          %v470 = vld [vmem:[#allocation4] sm:$0xff]
          %v471 = vrcp.pop %v470
          %473 = vset.pattern.permute.xlu0 0
          %474 = vperm.xlu0 %473, %v471
          %v475 = vpop.permute.xlu0 %474
          %v477 = vmul.f32 %v469, %v475
          %v478 = vpack.c.bf16 %v477, %v477
          %479 = vst [vmem:[%s265] sm:$0xf] %v478
        $region52: #{attention_head_pallas.3} parent=31 // pred_fallthru
          _
        %s480 = sand.u32 %s129, 1
        %s481 = scalar_lea.sflag [#allocation8], %s480
        %s482 = sand.u32 %s129, 1
        %s483 = smul.addr %s482, 4
        %s484 = scalar_lea.vmem [#allocation12], %s483
        // Predicated region
        $region53: #{attention_head_pallas.3} parent=31 // pred_check
          %p485 = pneg %p139
        $region54: #{attention_head_pallas.3} parent=31 // pred_check_branch
          %487 = sbr.rel (%p485) target = $region56
        $region55: #{attention_head_pallas.3} parent=31 // pred_region
          %s489 = ssub.s32 64, 64
          %490 = vsyncadd %s481, %s489
          %s491 = sadd.s32 %s29, %s28
          %s492 = smul.addr %s491, 64
          %s493 = scalar_lea.hbm %s3, %s492
          %s495 = sshll.u32 %s484, 4
          %s496 = int_to_ptr.vmem [resolvable:$true] %s495
          %498 = dma.vmem_to_hbm [thread:$0]  %s496, 64, %s493, %s481
        $region56: #{attention_head_pallas.3} parent=31 // pred_fallthru
          _
      $region32: #{attention_head_pallas.3} parent=5 // pred_fallthru
        _
      %p499 = scmp.le.s32.totalorder 2, %s18
      // Predicated region
      $region57: #{attention_head_pallas.3} parent=5 // pred_check
        %p500 = pneg %p499
      $region58: #{attention_head_pallas.3} parent=5 // pred_check_branch
        %502 = sbr.rel (%p500) target = $region60
      $region59: #{attention_head_pallas.3} parent=5 // pred_region
        %s503 = ssub.s32 %s18, 2
        // Predicated region
        $region61: #{attention_head_pallas.3} parent=59 // pred_check
          %p504 = pneg %p145
        $region62: #{attention_head_pallas.3} parent=59 // pred_check_branch
          %506 = sbr.rel (%p504) target = $region64
        $region63: #{attention_head_pallas.3} parent=59 // pred_region
          %s507 = sand.u32 %s130, 1
          %s508 = scalar_lea.sflag [#allocation8], %s507
          %s509 = sand.u32 %s130, 1
          %s510 = smul.addr %s509, 4
          %s511 = scalar_lea.vmem [#allocation12], %s510
          %512 = dma.done %s508, 64
        $region64: #{attention_head_pallas.3} parent=59 // pred_fallthru
          _
      $region60: #{attention_head_pallas.3} parent=5 // pred_fallthru
        _
    $region6: #{attention_head_pallas.3} parent=1 // loop_footer
      %s22 = sadd.s32 1, %s18
    $region7: #{attention_head_pallas.3} parent=1 // loop_footer_branch
      %17 = sbr.rel target = $region3
    $region8: #{attention_head_pallas.3} parent=1 // loop_exit
      _
    %513 = vsyncpa [#allocation7], 1
    %s514 = scalar_lea.sflag [#allocation7], 1
    %515 = vsyncpa %s514, 1
    %516 = vsyncpa [#allocation10], 1
    %s517 = scalar_lea.sflag [#allocation10], 1
    %518 = vsyncpa %s517, 1
    %519 = vsyncpa [#allocation8], 1
    %s520 = scalar_lea.sflag [#allocation8], 1
    %521 = vsyncpa %s520, 1

// kernel: attention_head_pallas.2
$region0: #{attention_head_pallas.2}
  #allocation0 [shape = 'u32[]', space=smem, size = 0x4, offset = 0x4, fixed_abs, tag = 'smem constant byte address 0x4 - core index']
  #allocation1 [shape = 'u32[144,128]{1,0:T(1,128)}', space=vmem, size = 0x12000, scoped, tag = 'internal scratch']
  %s0 = inlined_call_operand.hbm [shape: bf16[2,8,32], index: 0, kind: input, shape index: {}]
  %s1 = inlined_call_operand.hbm [shape: bf16[32,256], index: 1, kind: input, shape index: {}]
  %s2 = inlined_call_operand.hbm [shape: bf16[2,8,256], index: 2, kind: output, shape index: {}]
  %s3 = sld [smem:[#allocation0]]
  $region49: #{attention_head_pallas.2} parent=0
    _
  %s5 = ssub.s32 1, %s3
  %s6 = scalar_select 0, %s5, %s3
  $region1: #{attention_head_pallas.2} parent=0
    #allocation2 [shape = 'u8[4096]{0}', space=vmem, size = 0x1000, scoped, tag = 'input window, operand 0']
    #allocation3 [shape = 's32[2]{0}', space=sflag, size = 0x8, scoped, tag = 'scoped memory for attention_head_pallas.2']
    #allocation4 [shape = 's32[2]{0}', space=sflag, size = 0x8, scoped, tag = 'scoped memory for attention_head_pallas.2']
    #allocation5 [shape = 'u8[16384]{0}', space=vmem, size = 0x4000, scoped, tag = 'input window, operand 1, single buffered']
    #allocation6 [shape = 's32[1]{0}', space=sflag, size = 0x4, scoped, tag = 'scoped memory for attention_head_pallas.2']
    #allocation7 [shape = 'u8[8192]{0}', space=vmem, size = 0x2000, scoped, tag = 'output window, operand 0']
    %7 = vsyncpa [#allocation3], 0
    %s8 = scalar_lea.sflag [#allocation3], 1
    %9 = vsyncpa %s8, 0
    %10 = vsyncpa [#allocation6], 0
    %11 = vsyncpa [#allocation4], 0
    %s12 = scalar_lea.sflag [#allocation4], 1
    %13 = vsyncpa %s12, 0
    loop: start=0, step=1, limit=4
    $region2: #{attention_head_pallas.2} parent=1 // loop_pre_header
      _
    $region3: #{attention_head_pallas.2} parent=1 // loop_header
      %s15 = sphi 0, %s19
      %p16 = scmp.ge.s32.totalorder %s15, 4
      %s22 = sphi 0, %s34
      %s23 = sphi 0, %s30
      %s24 = sphi 0, %s22
      %s25 = sphi 0, %s23
      %s26 = sphi 0, %s24
      %s27 = sphi 0, %s25
      %s39 = sphi 0, %s41
      %s42 = sphi 0, %s39
      %s43 = sphi 0, %s42
      %s59 = sphi 0, %s43
      %s63 = sphi 0, %s63
      %s65 = sphi 0, %s63
      %s66 = sphi 0, %s65
      %s80 = sphi 0, %s66
      %s88 = sphi 0, %s90
      %s91 = sphi 0, %s88
      %s92 = sphi 0, %s91
      %s108 = sphi 0, %s92
    $region4: #{attention_head_pallas.2} parent=1 // loop_header_branch
      %18 = sbr.rel (%p16) target = $region8
    $region5: #{attention_head_pallas.2} parent=1 // loop_body
      %s20 = ssub.s32 %s15, 1
      %s21 = ssub.s32 %s15, 2
      %s28 = sadd.s32 1, %s23
      %p29 = scmp.ge.s32.totalorder %s28, 1
      %s30 = scalar_select %p29, 0, %s28
      %s31 = sadd.s32 1, %s22
      %s32 = scalar_select %p29, %s31, %s22
      %p33 = scmp.ge.s32.totalorder %s32, 2
      %s34 = scalar_select %p33, 0, %s32
      %s35 = ssub.s32 %s22, %s34
      %s36 = ssub.s32 %s23, %s30
      %s37 = sor.u32 %s35, %s36
      %p38 = scmp.eq.s32.totalorder %s37, 0
      %s40 = sadd.s32 %s39, 1
      %s41 = scalar_select %p38, %s39, %s40
      %p44 = pneg %p38
      %p45 = scmp.eq.s32.totalorder %s15, 1
      %p46 = por %p44, %p45
      %p47 = scmp.ne.s32.totalorder %s39, %s42
      %p48 = scmp.eq.s32.totalorder %s15, 0
      %p49 = por %p47, %p48
      %p50 = scmp.ne.s32.totalorder %s39, %s42
      %p51 = scmp.eq.s32.totalorder %s20, 1
      %p52 = por %p50, %p51
      %p53 = scmp.ne.s32.totalorder %s42, %s43
      %p54 = scmp.eq.s32.totalorder %s20, 0
      %p55 = por %p53, %p54
      %p56 = scmp.ne.s32.totalorder %s42, %s43
      %p57 = scmp.eq.s32.totalorder %s21, 1
      %p58 = por %p56, %p57
      %p60 = scmp.ne.s32.totalorder %s43, %s59
      %p61 = scmp.eq.s32.totalorder %s21, 0
      %p62 = por %p60, %p61
      %s64 = sadd.s32 %s63, 1
      %p67 = scmp.eq.s32.totalorder %s15, 1
      %p68 = scmp.ne.s32.totalorder %s63, %s65
      %p69 = scmp.eq.s32.totalorder %s15, 0
      %p70 = por %p68, %p69
      %p71 = scmp.ne.s32.totalorder %s63, %s65
      %p72 = scmp.eq.s32.totalorder %s20, 1
      %p73 = por %p71, %p72
      %p74 = scmp.ne.s32.totalorder %s65, %s66
      %p75 = scmp.eq.s32.totalorder %s20, 0
      %p76 = por %p74, %p75
      %p77 = scmp.ne.s32.totalorder %s65, %s66
      %p78 = scmp.eq.s32.totalorder %s21, 1
      %p79 = por %p77, %p78
      %p81 = scmp.ne.s32.totalorder %s66, %s80
      %p82 = scmp.eq.s32.totalorder %s21, 0
      %p83 = por %p81, %p82
      %s84 = ssub.s32 %s22, %s34
      %s85 = ssub.s32 %s23, %s30
      %s86 = sor.u32 %s84, %s85
      %p87 = scmp.eq.s32.totalorder %s86, 0
      %s89 = sadd.s32 %s88, 1
      %s90 = scalar_select %p87, %s88, %s89
      %p93 = pneg %p87
      %p94 = scmp.eq.s32.totalorder %s15, 1
      %p95 = por %p93, %p94
      %p96 = scmp.ne.s32.totalorder %s88, %s91
      %p97 = scmp.eq.s32.totalorder %s15, 0
      %p98 = por %p96, %p97
      %p99 = scmp.ne.s32.totalorder %s88, %s91
      %p100 = scmp.eq.s32.totalorder %s20, 1
      %p101 = por %p99, %p100
      %p102 = scmp.ne.s32.totalorder %s91, %s92
      %p103 = scmp.eq.s32.totalorder %s20, 0
      %p104 = por %p102, %p103
      %p105 = scmp.ne.s32.totalorder %s91, %s92
      %p106 = scmp.eq.s32.totalorder %s21, 1
      %p107 = por %p105, %p106
      %p109 = scmp.ne.s32.totalorder %s92, %s108
      %p110 = scmp.eq.s32.totalorder %s21, 0
      %p111 = por %p109, %p110
      %p112 = scmp.le.s32.totalorder 1, %s15
      %p113 = scmp.lt.s32.totalorder %s15, 3
      %p114 = pnand %p112, %p113
      %p115 = pneg %p114
      // Predicated region
      $region9: #{attention_head_pallas.2} parent=5 // pred_check
        _
      $region10: #{attention_head_pallas.2} parent=5 // pred_check_branch
        %117 = sbr.rel (%p114) target = $region12
      $region11: #{attention_head_pallas.2} parent=5 // pred_region
        %s118 = ssub.s32 %s15, 1
        // Predicated region
        $region13: #{attention_head_pallas.2} parent=11 // pred_check
          %p119 = pneg %p76
        $region14: #{attention_head_pallas.2} parent=11 // pred_check_branch
          %121 = sbr.rel (%p119) target = $region16
        $region15: #{attention_head_pallas.2} parent=11 // pred_region
          %s123 = ssub.s32 512, 512
          %124 = vsyncadd [#allocation6], %s123
          %s125 = sshll.u32 [#allocation5], 4
          %s126 = int_to_ptr.vmem [resolvable:$true] %s125
          %131 = dma.hbm_to_vmem [thread:$0]  %s1, 512, %s126, [#allocation6], 128, 128, 8
        $region16: #{attention_head_pallas.2} parent=11 // pred_fallthru
          _
      $region12: #{attention_head_pallas.2} parent=5 // pred_fallthru
        _
      %p132 = scmp.lt.s32.totalorder %s15, 2
      // Predicated region
      $region17: #{attention_head_pallas.2} parent=5 // pred_check
        %p133 = pneg %p132
      $region18: #{attention_head_pallas.2} parent=5 // pred_check_branch
        %135 = sbr.rel (%p133) target = $region20
      $region19: #{attention_head_pallas.2} parent=5 // pred_region
        // Predicated region
        $region21: #{attention_head_pallas.2} parent=19 // pred_check
          %p136 = pneg %p49
        $region22: #{attention_head_pallas.2} parent=19 // pred_check_branch
          %138 = sbr.rel (%p136) target = $region24
        $region23: #{attention_head_pallas.2} parent=19 // pred_region
          %s139 = sand.u32 %s39, 1
          %s140 = scalar_lea.sflag [#allocation3], %s139
          %s141 = sand.u32 %s39, 1
          %s142 = smul.addr %s141, 4
          %s143 = scalar_lea.vmem [#allocation2], %s142
          %s145 = ssub.s32 64, 64
          %146 = vsyncadd %s140, %s145
          %s147 = sadd.s32 %s23, %s22
          %s148 = smul.addr %s147, 64
          %s149 = scalar_lea.hbm %s0, %s148
          %s151 = sshll.u32 %s143, 4
          %s152 = int_to_ptr.vmem [resolvable:$true] %s151
          %154 = dma.hbm_to_vmem [thread:$0]  %s149, 64, %s152, %s140
        $region24: #{attention_head_pallas.2} parent=19 // pred_fallthru
          _
      $region20: #{attention_head_pallas.2} parent=5 // pred_fallthru
        _
      %p155 = scmp.le.s32.totalorder 1, %s15
      %p156 = scmp.lt.s32.totalorder %s15, 3
      %p157 = pnand %p155, %p156
      %p158 = pneg %p157
      // Predicated region
      $region25: #{attention_head_pallas.2} parent=5 // pred_check
        _
      $region26: #{attention_head_pallas.2} parent=5 // pred_check_branch
        %160 = sbr.rel (%p157) target = $region28
      $region27: #{attention_head_pallas.2} parent=5 // pred_region
        %s161 = ssub.s32 %s15, 1
        %s162 = sand.u32 %s42, 1
        %s163 = scalar_lea.sflag [#allocation3], %s162
        %s164 = sand.u32 %s42, 1
        %s165 = smul.addr %s164, 4
        %s166 = scalar_lea.vmem [#allocation2], %s165
        // Predicated region
        $region29: #{attention_head_pallas.2} parent=27 // pred_check
          %p167 = pneg %p55
        $region30: #{attention_head_pallas.2} parent=27 // pred_check_branch
          %169 = sbr.rel (%p167) target = $region32
        $region31: #{attention_head_pallas.2} parent=27 // pred_region
          %170 = dma.done %s163, 64
        $region32: #{attention_head_pallas.2} parent=27 // pred_fallthru
          _
        // Predicated region
        $region33: #{attention_head_pallas.2} parent=27 // pred_check
          %p171 = pneg %p76
        $region34: #{attention_head_pallas.2} parent=27 // pred_check_branch
          %173 = sbr.rel (%p171) target = $region36
        $region35: #{attention_head_pallas.2} parent=27 // pred_region
          %174 = dma.done [#allocation6], 512
        $region36: #{attention_head_pallas.2} parent=27 // pred_fallthru
          _
        %s175 = sand.u32 %s42, 1
        %s176 = scalar_lea.sflag [#allocation3], %s175
        %s177 = sand.u32 %s42, 1
        %s178 = smul.addr %s177, 4
        %s179 = scalar_lea.vmem [#allocation2], %s178
        %p180 = pneg %p55
        %p181 = pneg %p52
        %p182 = pneg %p76
        %p183 = pneg %p73
        %p184 = pneg %p104
        %p185 = pneg %p101
        %s186 = sand.u32 %s91, 1
        %s187 = scalar_lea.sflag [#allocation4], %s186
        %s188 = sand.u32 %s91, 1
        %s189 = smul.addr %s188, 8
        %s190 = scalar_lea.vmem [#allocation7], %s189
        %v192 = vld [vmem:[%s166] sm:$0xf]
        %v193 = vld [vmem:[#allocation5] sm:$0xff]
        %v194 = vld [vmem:[#allocation5 + $0x8] sm:$0xff]
        %v195 = vld [vmem:[#allocation5 + $0x10] sm:$0xff]
        %v196 = vld [vmem:[#allocation5 + $0x18] sm:$0xff]
        %v201 = vunpack.c.l.b16 %v193
        %v202 = vunpack.c.h.b16 %v193
        %v203 = vunpack.c.l.b16 %v194
        %v204 = vunpack.c.h.b16 %v194
        %v205 = vunpack.c.l.b16 %v195
        %v206 = vunpack.c.h.b16 %v195
        %v207 = vunpack.c.l.b16 %v196
        %v208 = vunpack.c.h.b16 %v196
        %v209 = vpack.c.b16 %v203, %v201
        %v210 = vpack.c.b16 %v204, %v202
        %v211 = vpack.c.b16 %v207, %v205
        %v212 = vpack.c.b16 %v208, %v206
        %vm217 = vcmask 261120
        %v219 = vsel %vm217, %v192, 0
        %221 = vmatprep.subr.bf16.mxu0 %v210
        %222 = vmatpush1.bf16.msra.mxu0 %v209
        %223 = vmatprep.subr.bf16.mxu0 %v212
        %224 = vmatpush1.bf16.msra.mxu0 %v211
        %225 = vmatprep.subr.bf16.mxu0 0
        %226 = vmatpush1.bf16.msra.mxu0 0
        %227 = vmatprep.subr.bf16.mxu0 0
        %228 = vmatpush1.bf16.msra.mxu0 0
        %229 = vmatprep.subr.bf16.mxu0 0
        %230 = vmatpush1.bf16.msra.mxu0 0
        %231 = vmatprep.subr.bf16.mxu0 0
        %232 = vmatpush1.bf16.msra.mxu0 0
        %233 = vmatprep.subr.bf16.mxu0 0
        %234 = vmatpush1.bf16.msra.mxu0 0
        %235 = vmatprep.subr.bf16.mxu0 0
        %236 = vmatpush1.bf16.msra.mxu0 0
        %237 = vmatprep.subr.bf16.mxu0 0
        %238 = vmatpush1.bf16.msra.mxu0 0
        %239 = vmatprep.subr.bf16.mxu0 0
        %240 = vmatpush1.bf16.msra.mxu0 0
        %241 = vmatprep.subr.bf16.mxu0 0
        %242 = vmatpush1.bf16.msra.mxu0 0
        %243 = vmatprep.subr.bf16.mxu0 0
        %244 = vmatpush1.bf16.msra.mxu0 0
        %245 = vmatprep.subr.bf16.mxu0 0
        %246 = vmatpush1.bf16.msra.mxu0 0
        %247 = vmatprep.subr.bf16.mxu0 0
        %248 = vmatpush1.bf16.msra.mxu0 0
        %249 = vmatprep.subr.bf16.mxu0 0
        %250 = vmatpush1.bf16.msra.mxu0 0
        %251 = vmatprep.subr.bf16.mxu0 0
        %252 = vmatpush1.bf16.msra.mxu0 0
        %253 = vmatprep.mubr.bf16.mxu0 0
        %254 = vmatmul.mubr.bf16.gmra.mrb[0].mxu0 %v219
        %v255 = vpop.f32.mrb[0].mxu0
        %v256 = vadd.f32 0.0, %v255
        %v257 = vpop.f32.mrb[0].mxu0
        %v258 = vadd.f32 0.0, %v257
        %v259 = vpop.f32.mrb[0].mxu0
        %v260 = vpop.f32.mrb[0].mxu0
        %261 = vdwg.mxu0
        %v262 = vpack.c.bf16 %v256, %v256
        %v263 = vpack.c.bf16 %v258, %v258
        %v266 = vunpack.c.l.b16 %v262
        %v267 = vunpack.c.l.b16 %v263
        %v268 = vpack.c.b16 %v267, %v266
        %270 = vst [vmem:[%s190] sm:$0xff] %v268
        %s271 = sand.u32 %s91, 1
        %s272 = scalar_lea.sflag [#allocation4], %s271
        %s273 = sand.u32 %s91, 1
        %s274 = smul.addr %s273, 8
        %s275 = scalar_lea.vmem [#allocation7], %s274
        // Predicated region
        $region37: #{attention_head_pallas.2} parent=27 // pred_check
          %p276 = pneg %p101
        $region38: #{attention_head_pallas.2} parent=27 // pred_check_branch
          %278 = sbr.rel (%p276) target = $region40
        $region39: #{attention_head_pallas.2} parent=27 // pred_region
          %s280 = ssub.s32 128, 128
          %281 = vsyncadd %s272, %s280
          %s282 = smul.addr %s25, 2
          %s283 = smul.addr %s24, 2
          %s284 = sadd.s32 %s282, %s283
          %s285 = smul.addr %s284, 64
          %s286 = scalar_lea.hbm %s2, %s285
          %s288 = sshll.u32 %s275, 4
          %s289 = int_to_ptr.vmem [resolvable:$true] %s288
          %291 = dma.vmem_to_hbm [thread:$0]  %s289, 128, %s286, %s272
        $region40: #{attention_head_pallas.2} parent=27 // pred_fallthru
          _
      $region28: #{attention_head_pallas.2} parent=5 // pred_fallthru
        _
      %p292 = scmp.le.s32.totalorder 2, %s15
      // Predicated region
      $region41: #{attention_head_pallas.2} parent=5 // pred_check
        %p293 = pneg %p292
      $region42: #{attention_head_pallas.2} parent=5 // pred_check_branch
        %295 = sbr.rel (%p293) target = $region44
      $region43: #{attention_head_pallas.2} parent=5 // pred_region
        %s296 = ssub.s32 %s15, 2
        // Predicated region
        $region45: #{attention_head_pallas.2} parent=43 // pred_check
          %p297 = pneg %p107
        $region46: #{attention_head_pallas.2} parent=43 // pred_check_branch
          %299 = sbr.rel (%p297) target = $region48
        $region47: #{attention_head_pallas.2} parent=43 // pred_region
          %s300 = sand.u32 %s92, 1
          %s301 = scalar_lea.sflag [#allocation4], %s300
          %s302 = sand.u32 %s92, 1
          %s303 = smul.addr %s302, 8
          %s304 = scalar_lea.vmem [#allocation7], %s303
          %305 = dma.done %s301, 128
        $region48: #{attention_head_pallas.2} parent=43 // pred_fallthru
          _
      $region44: #{attention_head_pallas.2} parent=5 // pred_fallthru
        _
    $region6: #{attention_head_pallas.2} parent=1 // loop_footer
      %s19 = sadd.s32 1, %s15
    $region7: #{attention_head_pallas.2} parent=1 // loop_footer_branch
      %14 = sbr.rel target = $region3
    $region8: #{attention_head_pallas.2} parent=1 // loop_exit
      _
    %306 = vsyncpa [#allocation3], 1
    %s307 = scalar_lea.sflag [#allocation3], 1
    %308 = vsyncpa %s307, 1
    %309 = vsyncpa [#allocation6], 1
    %310 = vsyncpa [#allocation4], 1
    %s311 = scalar_lea.sflag [#allocation4], 1
    %312 = vsyncpa %s311, 1

</llo_original>
